<compile_context>
chip_gen: v5e
topology: v5e:2x2
jax: 0.10.0
libtpu: 0.0.40
codegen_flags: <defaults>
</compile_context>

<pallas_src>
import math
import jax
import jax.numpy as jnp
from jax.experimental import pallas as pl
from jax.experimental.pallas import tpu as pltpu

DATA_DIM = 2
TIME_DIM = 2
IN_DIM = DATA_DIM + TIME_DIM          # 4
HIDDEN = 128
TOTAL_TIMESTEPS = 1000


# ---------------------------------------------------------------------------
# Sinusoidal positional embedding table (matches the PyTorch module exactly).
# ---------------------------------------------------------------------------
def sinusoidal_positional_encodings(embedding_dim=TIME_DIM, max_length=TOTAL_TIMESTEPS):
    position = jnp.arange(0, max_length, dtype=jnp.float32)[:, None]          # [L, 1]
    div_term = jnp.exp(
        jnp.arange(0, embedding_dim, 2, dtype=jnp.float32)
        * (-math.log(10000.0) / embedding_dim)
    )
    pe = jnp.zeros((max_length, embedding_dim), dtype=jnp.float32)
    pe = pe.at[:, 0::2].set(jnp.sin(position * div_term))
    pe = pe.at[:, 1::2].set(jnp.cos(position * div_term))
    return pe


# ---------------------------------------------------------------------------
# Pallas kernel: feature-major 3-layer MLP on one batch tile.
#   h1 = relu(W1^T @ xt + b1)        [128, tb]   (xt = [x; pe(t)], K = 4)
#   h2 = relu(W2^T @ h1 + b2)        [128, tb]
#   y  =       W3^T @ h2 + b3        [  2, tb]   (lane-dense output tile)
# bf16 MXU operands, f32 accumulation; bias-add / ReLU in f32 on the VPU.
# ---------------------------------------------------------------------------
def score_mlp_kernel(xt_ref, w1_ref, b1_ref, w2_ref, b2_ref, w3_ref, b3_ref, o_ref):
    h1 = jnp.dot(w1_ref[...], xt_ref[...], preferred_element_type=jnp.float32)   # [128, tb]
    h1 = jnp.maximum(h1 + b1_ref[...], 0.0)
    h2 = jnp.dot(w2_ref[...], h1.astype(jnp.bfloat16),
                 preferred_element_type=jnp.float32)                             # [128, tb]
    h2 = jnp.maximum(h2 + b2_ref[...], 0.0)
    out = jnp.dot(w3_ref[...], h2.astype(jnp.bfloat16),
                  preferred_element_type=jnp.float32) + b3_ref[...]              # [2, tb]
    o_ref[...] = out.astype(o_ref.dtype)


def _default_batch_tile(B):
    """Large tiles for DMA/step-overhead amortization, but >= ~8 grid steps on
    big batches so the 'parallel' axis shards across v7x's two TensorCores."""
    padded = pl.cdiv(B, 128) * 128
    tgt = max(128, (padded // 8) // 128 * 128)
    return min(4096, tgt, padded)


def score_network_forward(x, time, params, *, batch_tile=None):
    """x: [B, DATA_DIM] float32, time: [B] int32 -> [B, DATA_DIM] float32."""
    B = x.shape[0]
    tb = _default_batch_tile(B) if batch_tile is None else batch_tile
    assert tb % 128 == 0, "batch_tile must be a multiple of 128 (lane axis)"
    padded_B = pl.cdiv(B, tb) * tb
    pad = padded_B - B
    if pad:
        x = jnp.pad(x, ((0, pad), (0, 0)))
        time = jnp.pad(time, ((0, pad),))

    # Single feature-major bf16 activation input: [x; pe(t)]^T -> [4, padded_B].
    xt = jnp.concatenate([x, params["pe"][time, :]], axis=-1).T.astype(jnp.bfloat16)

    # Weights feature-major, bf16 operands; biases stay f32 (f32 add in-kernel).
    w1t = params["w1"].T.astype(jnp.bfloat16)                                   # [128, 4]
    b1 = params["b1"].T                                                         # [128, 1]
    w2t = params["w2"].T.astype(jnp.bfloat16)                                   # [128, 128]
    b2 = params["b2"].T                                                         # [128, 1]
    w3t = params["w3"].T.astype(jnp.bfloat16)                                   # [2, 128]
    b3 = params["b3"].T                                                         # [2, 1]

    grid = (padded_B // tb,)
    const = lambda shape: pl.BlockSpec(shape, lambda i: (0, 0))
    # NOTE: the constant weight/bias blocks could use pipeline_mode=pl.Buffered(1)
    # to drop their dead second pipeline buffer (~35 KB VMEM); omitted for
    # maximum compile portability — VMEM is nowhere near full here.

    flops = 2 * padded_B * (IN_DIM * HIDDEN + HIDDEN * HIDDEN + HIDDEN * DATA_DIM)
    bytes_accessed = (
        padded_B * IN_DIM * 2                                                   # xt (bf16)
        + padded_B * DATA_DIM * 4                                               # output (f32)
        + (HIDDEN * IN_DIM + HIDDEN * HIDDEN + DATA_DIM * HIDDEN) * 2           # bf16 weights
        + (HIDDEN + HIDDEN + DATA_DIM) * 4                                      # f32 biases
    )

    out_t = pl.pallas_call(
        score_mlp_kernel,
        out_shape=jax.ShapeDtypeStruct((DATA_DIM, padded_B), jnp.float32),
        grid_spec=pltpu.PrefetchScalarGridSpec(
            num_scalar_prefetch=0,
            grid=grid,
            in_specs=[
                pl.BlockSpec((IN_DIM, tb), lambda i: (0, i)),                    # [x; pe] tile
                const((HIDDEN, IN_DIM)),                                         # W1^T
                const((HIDDEN, 1)),                                              # b1
                const((HIDDEN, HIDDEN)),                                         # W2^T
                const((HIDDEN, 1)),                                              # b2
                const((DATA_DIM, HIDDEN)),                                       # W3^T
                const((DATA_DIM, 1)),                                            # b3
            ],
            out_specs=pl.BlockSpec((DATA_DIM, tb), lambda i: (0, i)),            # lane-dense out
        ),
        compiler_params=pltpu.CompilerParams(
            dimension_semantics=("parallel",),
        ),
        cost_estimate=pl.CostEstimate(
            flops=flops, transcendentals=0, bytes_accessed=bytes_accessed
        ),
    )(xt, w1t, b1, w2t, b2, w3t, b3)

    return out_t.T[:B]                                                           # [B, 2]


# ---------------------------------------------------------------------------
# Deterministic parameter init (mirrors nn.Linear default: U(-1/sqrt(fan_in), +))
# ---------------------------------------------------------------------------
def init_params(key):
    def linear(key, fan_in, fan_out):
        kw, kb = jax.random.split(key)
        bound = 1.0 / math.sqrt(fan_in)
        w = jax.random.uniform(kw, (fan_in, fan_out), jnp.float32, -bound, bound)
        b = jax.random.uniform(kb, (1, fan_out), jnp.float32, -bound, bound)
        return w, b

    k1, k2, k3 = jax.random.split(key, 3)
    w1, b1 = linear(k1, IN_DIM, HIDDEN)
    w2, b2 = linear(k2, HIDDEN, HIDDEN)
    w3, b3 = linear(k3, HIDDEN, DATA_DIM)
    return {
        "pe": sinusoidal_positional_encodings(TIME_DIM, TOTAL_TIMESTEPS),
        "w1": w1, "b1": b1,
        "w2": w2, "b2": b2,
        "w3": w3, "b3": b3,
    }


# Pure-f32 reference (original PyTorch semantics).
def score_network_ref(x, time, params):
    xt = jnp.concatenate([x, params["pe"][time, :]], axis=-1)
    h1 = jnp.maximum(xt @ params["w1"] + params["b1"], 0.0)
    h2 = jnp.maximum(h1 @ params["w2"] + params["b2"], 0.0)
    return h2 @ params["w3"] + params["b3"]


# bf16-operand mirror reference (same arithmetic as the kernel) for a tight check.
def score_network_ref_bf16(x, time, params):
    xt = jnp.concatenate([x, params["pe"][time, :]], axis=-1).astype(jnp.bfloat16)
    h1 = jnp.maximum(
        jnp.dot(xt, params["w1"].astype(jnp.bfloat16),
                preferred_element_type=jnp.float32) + params["b1"], 0.0)
    h2 = jnp.maximum(
        jnp.dot(h1.astype(jnp.bfloat16), params["w2"].astype(jnp.bfloat16),
                preferred_element_type=jnp.float32) + params["b2"], 0.0)
    return jnp.dot(h2.astype(jnp.bfloat16), params["w3"].astype(jnp.bfloat16),
                   preferred_element_type=jnp.float32) + params["b3"]


if __name__ == "__main__":
    key = jax.random.PRNGKey(0)
    kp, kx, kt, kx2, kt2 = jax.random.split(key, 5)

    params = init_params(kp)

    # Small demo batch (padded up to one 128-lane tile inside the wrapper).
    B = 8
    x = jax.random.normal(kx, (B, DATA_DIM), dtype=jnp.float32)
    time = jax.random.randint(kt, (B,), 0, TOTAL_TIMESTEPS, dtype=jnp.int32)

    out = jax.block_until_ready(score_network_forward(x, time, params))
    assert out.shape == (B, DATA_DIM)
    # Tight check vs. a bf16-operand mirror of the kernel arithmetic ...
    assert jnp.allclose(out, score_network_ref_bf16(x, time, params), atol=2e-3, rtol=2e-3)
    # ... and a loose check vs. the exact f32 reference (bf16 operand rounding).
    assert jnp.allclose(out, score_network_ref(x, time, params), atol=5e-2, rtol=5e-2)

    # Second check: batch not divisible by the tile -> padding + multi-step
    # ("parallel") grid, exercising the pipelined / megacore path.
    B2 = 300
    x2 = jax.random.normal(kx2, (B2, DATA_DIM), dtype=jnp.float32)
    time2 = jax.random.randint(kt2, (B2,), 0, TOTAL_TIMESTEPS, dtype=jnp.int32)
    out2 = jax.block_until_ready(
        score_network_forward(x2, time2, params, batch_tile=128))
    assert out2.shape == (B2, DATA_DIM)
    assert jnp.allclose(out2, score_network_ref_bf16(x2, time2, params), atol=2e-3, rtol=2e-3)
    assert jnp.allclose(out2, score_network_ref(x2, time2, params), atol=5e-2, rtol=5e-2)

    print("KERNEL_OK")
</pallas_src>

<mosaic_0001>
module attributes {stable_mosaic.version = 11 : i64} {
  func.func @score_mlp_kernel(%arg0: i32, %arg1: memref<4x128xbf16, #tpu.memory_space<vmem>>, %arg2: memref<128x4xbf16, #tpu.memory_space<vmem>>, %arg3: memref<128x1xf32, #tpu.memory_space<vmem>>, %arg4: memref<128x128xbf16, #tpu.memory_space<vmem>>, %arg5: memref<128x1xf32, #tpu.memory_space<vmem>>, %arg6: memref<2x128xbf16, #tpu.memory_space<vmem>>, %arg7: memref<2x1xf32, #tpu.memory_space<vmem>>, %arg8: memref<2x128xf32, #tpu.memory_space<vmem>>) attributes {dimension_semantics = [#tpu.dimension_semantics<parallel>], iteration_bounds = array<i64: 1>, scalar_prefetch = 0 : i64, scratch_operands = 0 : i64, tpu.core_type = #tpu.core_type<tc>, window_params = [{transform_indices = @transform_0, window_bounds = array<i64: 4, 128>}, {pipeline_mode = #tpu.pipeline_mode<synchronous>, transform_indices = @transform_1, window_bounds = array<i64: 128, 4>}, {pipeline_mode = #tpu.pipeline_mode<synchronous>, transform_indices = @transform_2, window_bounds = array<i64: 128, 1>}, {pipeline_mode = #tpu.pipeline_mode<synchronous>, transform_indices = @transform_3, window_bounds = array<i64: 128, 128>}, {pipeline_mode = #tpu.pipeline_mode<synchronous>, transform_indices = @transform_4, window_bounds = array<i64: 128, 1>}, {pipeline_mode = #tpu.pipeline_mode<synchronous>, transform_indices = @transform_5, window_bounds = array<i64: 2, 128>}, {pipeline_mode = #tpu.pipeline_mode<synchronous>, transform_indices = @transform_6, window_bounds = array<i64: 2, 1>}, {transform_indices = @transform_7, window_bounds = array<i64: 2, 128>}]} {
    %c0 = arith.constant 0 : index
    %c0_0 = arith.constant 0 : index
    %0 = vector.load %arg2[%c0, %c0_0] : memref<128x4xbf16, #tpu.memory_space<vmem>>, vector<128x4xbf16>
    %c0_1 = arith.constant 0 : index
    %c0_2 = arith.constant 0 : index
    %1 = vector.load %arg1[%c0_1, %c0_2] : memref<4x128xbf16, #tpu.memory_space<vmem>>, vector<4x128xbf16>
    %cst = arith.constant dense<0.000000e+00> : vector<128x128xf32>
    %2 = tpu.matmul %0, %1, %cst {dimension_numbers = #tpu.dot_dimension_numbers<[1], [0], [0], [1], [0, 0, 1, 1], [], []>} : vector<128x4xbf16>, vector<4x128xbf16>, vector<128x128xf32> -> vector<128x128xf32>
    %c0_3 = arith.constant 0 : index
    %c0_4 = arith.constant 0 : index
    %3 = vector.load %arg3[%c0_3, %c0_4] : memref<128x1xf32, #tpu.memory_space<vmem>>, vector<128x1xf32>
    %4 = vector.broadcast %3 : vector<128x1xf32> to vector<128x128xf32>
    %5 = arith.addf %2, %4 : vector<128x128xf32>
    %cst_5 = arith.constant 0.000000e+00 : f32
    %6 = vector.broadcast %cst_5 : f32 to vector<128x128xf32>
    %7 = arith.maximumf %5, %6 : vector<128x128xf32>
    %c0_6 = arith.constant 0 : index
    %c0_7 = arith.constant 0 : index
    %8 = vector.load %arg4[%c0_6, %c0_7] : memref<128x128xbf16, #tpu.memory_space<vmem>>, vector<128x128xbf16>
    %9 = arith.truncf %7 : vector<128x128xf32> to vector<128x128xbf16>
    %cst_8 = arith.constant dense<0.000000e+00> : vector<128x128xf32>
    %10 = tpu.matmul %8, %9, %cst_8 {dimension_numbers = #tpu.dot_dimension_numbers<[1], [0], [0], [1], [0, 0, 1, 1], [], []>} : vector<128x128xbf16>, vector<128x128xbf16>, vector<128x128xf32> -> vector<128x128xf32>
    %c0_9 = arith.constant 0 : index
    %c0_10 = arith.constant 0 : index
    %11 = vector.load %arg5[%c0_9, %c0_10] : memref<128x1xf32, #tpu.memory_space<vmem>>, vector<128x1xf32>
    %12 = vector.broadcast %11 : vector<128x1xf32> to vector<128x128xf32>
    %13 = arith.addf %10, %12 : vector<128x128xf32>
    %cst_11 = arith.constant 0.000000e+00 : f32
    %14 = vector.broadcast %cst_11 : f32 to vector<128x128xf32>
    %15 = arith.maximumf %13, %14 : vector<128x128xf32>
    %c0_12 = arith.constant 0 : index
    %c0_13 = arith.constant 0 : index
    %16 = vector.load %arg6[%c0_12, %c0_13] : memref<2x128xbf16, #tpu.memory_space<vmem>>, vector<2x128xbf16>
    %17 = arith.truncf %15 : vector<128x128xf32> to vector<128x128xbf16>
    %cst_14 = arith.constant dense<0.000000e+00> : vector<2x128xf32>
    %18 = tpu.matmul %16, %17, %cst_14 {dimension_numbers = #tpu.dot_dimension_numbers<[1], [0], [0], [1], [0, 0, 1, 1], [], []>} : vector<2x128xbf16>, vector<128x128xbf16>, vector<2x128xf32> -> vector<2x128xf32>
    %c0_15 = arith.constant 0 : index
    %c0_16 = arith.constant 0 : index
    %19 = vector.load %arg7[%c0_15, %c0_16] : memref<2x1xf32, #tpu.memory_space<vmem>>, vector<2x1xf32>
    %20 = vector.broadcast %19 : vector<2x1xf32> to vector<2x128xf32>
    %21 = arith.addf %18, %20 : vector<2x128xf32>
    %c0_17 = arith.constant 0 : index
    %c0_18 = arith.constant 0 : index
    %22 = vector.load %arg8[%c0_17, %c0_18] : memref<2x128xf32, #tpu.memory_space<vmem>>, vector<2x128xf32>
    tpu.vector_store %arg8[%c0_17, %c0_18], %21 {strides = array<i32>} : memref<2x128xf32, #tpu.memory_space<vmem>>, vector<2x128xf32>,
    return
  }
  func.func @transform_0(%arg0: i32) -> (i32, i32) {
    %c0_i32 = arith.constant 0 : i32
    %c0_i32_0 = arith.constant 0 : i32
    return %c0_i32, %arg0 : i32, i32
  }
  func.func @transform_1(%arg0: i32) -> (i32, i32) {
    %c0_i32 = arith.constant 0 : i32
    %c0_i32_0 = arith.constant 0 : i32
    %c0_i32_1 = arith.constant 0 : i32
    return %c0_i32, %c0_i32_0 : i32, i32
  }
  func.func @transform_2(%arg0: i32) -> (i32, i32) {
    %c0_i32 = arith.constant 0 : i32
    %c0_i32_0 = arith.constant 0 : i32
    %c0_i32_1 = arith.constant 0 : i32
    return %c0_i32, %c0_i32_0 : i32, i32
  }
  func.func @transform_3(%arg0: i32) -> (i32, i32) {
    %c0_i32 = arith.constant 0 : i32
    %c0_i32_0 = arith.constant 0 : i32
    %c0_i32_1 = arith.constant 0 : i32
    return %c0_i32, %c0_i32_0 : i32, i32
  }
  func.func @transform_4(%arg0: i32) -> (i32, i32) {
    %c0_i32 = arith.constant 0 : i32
    %c0_i32_0 = arith.constant 0 : i32
    %c0_i32_1 = arith.constant 0 : i32
    return %c0_i32, %c0_i32_0 : i32, i32
  }
  func.func @transform_5(%arg0: i32) -> (i32, i32) {
    %c0_i32 = arith.constant 0 : i32
    %c0_i32_0 = arith.constant 0 : i32
    %c0_i32_1 = arith.constant 0 : i32
    return %c0_i32, %c0_i32_0 : i32, i32
  }
  func.func @transform_6(%arg0: i32) -> (i32, i32) {
    %c0_i32 = arith.constant 0 : i32
    %c0_i32_0 = arith.constant 0 : i32
    %c0_i32_1 = arith.constant 0 : i32
    return %c0_i32, %c0_i32_0 : i32, i32
  }
  func.func @transform_7(%arg0: i32) -> (i32, i32) {
    %c0_i32 = arith.constant 0 : i32
    %c0_i32_0 = arith.constant 0 : i32
    return %c0_i32, %arg0 : i32, i32
  }
}

</mosaic_0001>

<llo_original>
// kernel: tpu_custom_call.1
$region0: #{tpu_custom_call.1}
  #allocation0 [shape = 'u32[]', space=smem, size = 0x4, offset = 0x4, fixed_abs, tag = 'smem constant byte address 0x4 - core index']
  #allocation1 [shape = 'u32[72,128]{1,0:T(1,128)}', space=vmem, size = 0x9000, scoped, tag = 'internal scratch']
  %s0 = inlined_call_operand.vmem [shape: bf16[4,128], index: 0, kind: input, shape index: {}]
  %s1 = inlined_call_operand.vmem [shape: bf16[128,4], index: 1, kind: input, shape index: {}]
  %s2 = inlined_call_operand.vmem [shape: f32[128,1], index: 2, kind: input, shape index: {}]
  %s3 = inlined_call_operand.vmem [shape: bf16[128,128], index: 3, kind: input, shape index: {}]
  %s4 = inlined_call_operand.vmem [shape: f32[128,1], index: 4, kind: input, shape index: {}]
  %s5 = inlined_call_operand.vmem [shape: bf16[2,128], index: 5, kind: input, shape index: {}]
  %s6 = inlined_call_operand.vmem [shape: f32[2,1], index: 6, kind: input, shape index: {}]
  %s7 = inlined_call_operand.hbm [shape: f32[2,128], index: 7, kind: output, shape index: {}]
  %s8 = sld [smem:[#allocation0]]
  $region38: #{tpu_custom_call.1} parent=0
    _
  %s10 = ssub.s32 1, %s8
  %s11 = scalar_select 0, %s10, %s8
  $region1: #{tpu_custom_call.1} parent=0
    #allocation2 [shape = 'u8[1024]{0}', space=vmem, size = 0x400, scoped, tag = 'output window, operand 0, single buffered']
    #allocation3 [shape = 's32[1]{0}', space=sflag, size = 0x4, scoped, tag = 'scoped memory for tpu_custom_call.1']
    %12 = vsyncpa [#allocation3], 0
    // Predicated region
    $region2: #{tpu_custom_call.1} parent=1 // pred_check
      _
    $region3: #{tpu_custom_call.1} parent=1 // pred_check_branch
      %14 = sbr.rel (0) target = $region5
    $region4: #{tpu_custom_call.1} parent=1 // pred_region
      _
    $region5: #{tpu_custom_call.1} parent=1 // pred_fallthru
      _
    // Predicated region
    $region6: #{tpu_custom_call.1} parent=1 // pred_check
      _
    $region7: #{tpu_custom_call.1} parent=1 // pred_check_branch
      %16 = sbr.rel (0) target = $region9
    $region8: #{tpu_custom_call.1} parent=1 // pred_region
      _
    $region9: #{tpu_custom_call.1} parent=1 // pred_fallthru
      _
    // Predicated region
    $region10: #{tpu_custom_call.1} parent=1 // pred_check
      _
    $region11: #{tpu_custom_call.1} parent=1 // pred_check_branch
      %18 = sbr.rel (0) target = $region13
    $region12: #{tpu_custom_call.1} parent=1 // pred_region
      _
    $region13: #{tpu_custom_call.1} parent=1 // pred_fallthru
      _
    // Predicated region
    $region14: #{tpu_custom_call.1} parent=1 // pred_check
      _
    $region15: #{tpu_custom_call.1} parent=1 // pred_check_branch
      %20 = sbr.rel (0) target = $region17
    $region16: #{tpu_custom_call.1} parent=1 // pred_region
      _
    $region17: #{tpu_custom_call.1} parent=1 // pred_fallthru
      _
    // Predicated region
    $region18: #{tpu_custom_call.1} parent=1 // pred_check
      _
    $region19: #{tpu_custom_call.1} parent=1 // pred_check_branch
      %22 = sbr.rel (0) target = $region21
    $region20: #{tpu_custom_call.1} parent=1 // pred_region
      _
    $region21: #{tpu_custom_call.1} parent=1 // pred_fallthru
      _
    // Predicated region
    $region22: #{tpu_custom_call.1} parent=1 // pred_check
      _
    $region23: #{tpu_custom_call.1} parent=1 // pred_check_branch
      %24 = sbr.rel (0) target = $region25
    $region24: #{tpu_custom_call.1} parent=1 // pred_region
      _
    $region25: #{tpu_custom_call.1} parent=1 // pred_fallthru
      _
    // Predicated region
    $region26: #{tpu_custom_call.1} parent=1 // pred_check
      _
    $region27: #{tpu_custom_call.1} parent=1 // pred_check_branch
      %26 = sbr.rel (0) target = $region29
    $region28: #{tpu_custom_call.1} parent=1 // pred_region
      _
    $region29: #{tpu_custom_call.1} parent=1 // pred_fallthru
      _
    %v28 = vld [vmem:[%s1] sm:$0xf]
    %v29 = vld [vmem:[%s1 + $0x4] sm:$0xf]
    %v30 = vld [vmem:[%s1 + $0x8] sm:$0xf]
    %v31 = vld [vmem:[%s1 + $0xc] sm:$0xf]
    %v32 = vld [vmem:[%s1 + $0x10] sm:$0xf]
    %v33 = vld [vmem:[%s1 + $0x14] sm:$0xf]
    %v34 = vld [vmem:[%s1 + $0x18] sm:$0xf]
    %v35 = vld [vmem:[%s1 + $0x1c] sm:$0xf]
    %v36 = vld [vmem:[%s1 + $0x20] sm:$0xf]
    %v37 = vld [vmem:[%s1 + $0x24] sm:$0xf]
    %v38 = vld [vmem:[%s1 + $0x28] sm:$0xf]
    %v39 = vld [vmem:[%s1 + $0x2c] sm:$0xf]
    %v40 = vld [vmem:[%s1 + $0x30] sm:$0xf]
    %v41 = vld [vmem:[%s1 + $0x34] sm:$0xf]
    %v42 = vld [vmem:[%s1 + $0x38] sm:$0xf]
    %v43 = vld [vmem:[%s1 + $0x3c] sm:$0xf]
    %v44 = vld [vmem:[%s0] sm:$0x3]
    %v45 = vld [vmem:[%s2] sm:$0xff]
    %v46 = vld [vmem:[%s2 + $0x8] sm:$0xff]
    %v47 = vld [vmem:[%s2 + $0x10] sm:$0xff]
    %v48 = vld [vmem:[%s2 + $0x18] sm:$0xff]
    %v49 = vld [vmem:[%s2 + $0x20] sm:$0xff]
    %v50 = vld [vmem:[%s2 + $0x28] sm:$0xff]
    %v51 = vld [vmem:[%s2 + $0x30] sm:$0xff]
    %v52 = vld [vmem:[%s2 + $0x38] sm:$0xff]
    %v53 = vld [vmem:[%s2 + $0x40] sm:$0xff]
    %v54 = vld [vmem:[%s2 + $0x48] sm:$0xff]
    %v55 = vld [vmem:[%s2 + $0x50] sm:$0xff]
    %v56 = vld [vmem:[%s2 + $0x58] sm:$0xff]
    %v57 = vld [vmem:[%s2 + $0x60] sm:$0xff]
    %v58 = vld [vmem:[%s2 + $0x68] sm:$0xff]
    %v59 = vld [vmem:[%s2 + $0x70] sm:$0xff]
    %v60 = vld [vmem:[%s2 + $0x78] sm:$0xff]
    %62 = vset.pattern.permute.xlu0 0
    %63 = vperm.xlu0 %62, %v45
    %v64 = vpop.permute.xlu0 %63
    %67 = vset.pattern.permute.xlu0 0
    %68 = vperm.xlu0 %67, %v46
    %v69 = vpop.permute.xlu0 %68
    %72 = vset.pattern.permute.xlu0 0
    %73 = vperm.xlu0 %72, %v47
    %v74 = vpop.permute.xlu0 %73
    %77 = vset.pattern.permute.xlu0 0
    %78 = vperm.xlu0 %77, %v48
    %v79 = vpop.permute.xlu0 %78
    %82 = vset.pattern.permute.xlu0 0
    %83 = vperm.xlu0 %82, %v49
    %v84 = vpop.permute.xlu0 %83
    %87 = vset.pattern.permute.xlu0 0
    %88 = vperm.xlu0 %87, %v50
    %v89 = vpop.permute.xlu0 %88
    %92 = vset.pattern.permute.xlu0 0
    %93 = vperm.xlu0 %92, %v51
    %v94 = vpop.permute.xlu0 %93
    %97 = vset.pattern.permute.xlu0 0
    %98 = vperm.xlu0 %97, %v52
    %v99 = vpop.permute.xlu0 %98
    %102 = vset.pattern.permute.xlu0 0
    %103 = vperm.xlu0 %102, %v53
    %v104 = vpop.permute.xlu0 %103
    %107 = vset.pattern.permute.xlu0 0
    %108 = vperm.xlu0 %107, %v54
    %v109 = vpop.permute.xlu0 %108
    %112 = vset.pattern.permute.xlu0 0
    %113 = vperm.xlu0 %112, %v55
    %v114 = vpop.permute.xlu0 %113
    %117 = vset.pattern.permute.xlu0 0
    %118 = vperm.xlu0 %117, %v56
    %v119 = vpop.permute.xlu0 %118
    %122 = vset.pattern.permute.xlu0 0
    %123 = vperm.xlu0 %122, %v57
    %v124 = vpop.permute.xlu0 %123
    %127 = vset.pattern.permute.xlu0 0
    %128 = vperm.xlu0 %127, %v58
    %v129 = vpop.permute.xlu0 %128
    %132 = vset.pattern.permute.xlu0 0
    %133 = vperm.xlu0 %132, %v59
    %v134 = vpop.permute.xlu0 %133
    %137 = vset.pattern.permute.xlu0 0
    %138 = vperm.xlu0 %137, %v60
    %v139 = vpop.permute.xlu0 %138
    %v157 = vunpack.c.l.b16 %v28
    %v158 = vunpack.c.l.b16 %v29
    %v159 = vunpack.c.l.b16 %v30
    %v160 = vunpack.c.l.b16 %v31
    %v161 = vunpack.c.l.b16 %v32
    %v162 = vunpack.c.l.b16 %v33
    %v163 = vunpack.c.l.b16 %v34
    %v164 = vunpack.c.l.b16 %v35
    %v165 = vunpack.c.l.b16 %v36
    %v166 = vunpack.c.l.b16 %v37
    %v167 = vunpack.c.l.b16 %v38
    %v168 = vunpack.c.l.b16 %v39
    %v169 = vunpack.c.l.b16 %v40
    %v170 = vunpack.c.l.b16 %v41
    %v171 = vunpack.c.l.b16 %v42
    %v172 = vunpack.c.l.b16 %v43
    %v173 = vpack.c.b16 %v158, %v157
    %v174 = vpack.c.b16 %v160, %v159
    %v175 = vpack.c.b16 %v162, %v161
    %v176 = vpack.c.b16 %v164, %v163
    %v177 = vpack.c.b16 %v166, %v165
    %v178 = vpack.c.b16 %v168, %v167
    %v179 = vpack.c.b16 %v170, %v169
    %v180 = vpack.c.b16 %v172, %v171
    %vm181 = vcmask 31744
    %v183 = vsel %vm181, %v173, 0
    %v186 = vsel %vm181, %v174, 0
    %v189 = vsel %vm181, %v175, 0
    %v192 = vsel %vm181, %v176, 0
    %v195 = vsel %vm181, %v177, 0
    %v198 = vsel %vm181, %v178, 0
    %v201 = vsel %vm181, %v179, 0
    %v204 = vsel %vm181, %v180, 0
    %vm206 = vcmask 1041408
    %v208 = vsel %vm206, %v44, 0
    %210 = vmatpush.bf16.msra.mxu0 0
    %211 = vmatpush.bf16.msra.mxu0 0
    %212 = vmatpush.bf16.msra.mxu0 0
    %213 = vmatpush.bf16.msra.mxu0 0
    %214 = vmatpush.bf16.msra.mxu0 0
    %215 = vmatpush.bf16.msra.mxu0 0
    %216 = vmatpush.bf16.msra.mxu0 0
    %217 = vmatpush.bf16.msra.mxu0 %v208
    %218 = vmatmul.bf16.gmra.mxu0 %v183
    %v219 = vpop.f32.mrf.mxu0
    %v220 = vadd.f32 %v64, %v219
    %v221 = vpop.f32.mrf.mxu0
    %v222 = vadd.f32 %v69, %v221
    %223 = vmatmul.bf16.gmra.mxu0 %v186
    %v224 = vpop.f32.mrf.mxu0
    %v225 = vadd.f32 %v74, %v224
    %v226 = vpop.f32.mrf.mxu0
    %v227 = vadd.f32 %v79, %v226
    %228 = vmatmul.bf16.gmra.mxu0 %v189
    %v229 = vpop.f32.mrf.mxu0
    %v230 = vadd.f32 %v84, %v229
    %v231 = vpop.f32.mrf.mxu0
    %v232 = vadd.f32 %v89, %v231
    %233 = vmatmul.bf16.gmra.mxu0 %v192
    %v234 = vpop.f32.mrf.mxu0
    %v235 = vadd.f32 %v94, %v234
    %v236 = vpop.f32.mrf.mxu0
    %v237 = vadd.f32 %v99, %v236
    %238 = vmatmul.bf16.gmra.mxu0 %v195
    %v239 = vpop.f32.mrf.mxu0
    %v240 = vadd.f32 %v104, %v239
    %v241 = vpop.f32.mrf.mxu0
    %v242 = vadd.f32 %v109, %v241
    %243 = vmatmul.bf16.gmra.mxu0 %v198
    %v244 = vpop.f32.mrf.mxu0
    %v245 = vadd.f32 %v114, %v244
    %v246 = vpop.f32.mrf.mxu0
    %v247 = vadd.f32 %v119, %v246
    %248 = vmatmul.bf16.gmra.mxu0 %v201
    %v249 = vpop.f32.mrf.mxu0
    %v250 = vadd.f32 %v124, %v249
    %v251 = vpop.f32.mrf.mxu0
    %v252 = vadd.f32 %v129, %v251
    %253 = vmatmul.bf16.gmra.mxu0 %v204
    %v254 = vpop.f32.mrf.mxu0
    %v255 = vadd.f32 %v134, %v254
    %v256 = vpop.f32.mrf.mxu0
    %v257 = vadd.f32 %v139, %v256
    %258 = vdwg.mxu0
    %v259 = vmax.f32 %v220, 0.0
    %v260 = vmax.f32 %v222, 0.0
    %v261 = vmax.f32 %v225, 0.0
    %v262 = vmax.f32 %v227, 0.0
    %v263 = vmax.f32 %v230, 0.0
    %v264 = vmax.f32 %v232, 0.0
    %v265 = vmax.f32 %v235, 0.0
    %v266 = vmax.f32 %v237, 0.0
    %v267 = vmax.f32 %v240, 0.0
    %v268 = vmax.f32 %v242, 0.0
    %v269 = vmax.f32 %v245, 0.0
    %v270 = vmax.f32 %v247, 0.0
    %v271 = vmax.f32 %v250, 0.0
    %v272 = vmax.f32 %v252, 0.0
    %v273 = vmax.f32 %v255, 0.0
    %v274 = vmax.f32 %v257, 0.0
    %v275 = vld [vmem:[%s3] sm:$0xf]
    %v276 = vld [vmem:[%s3 + $0x4] sm:$0xf]
    %v277 = vld [vmem:[%s3 + $0x8] sm:$0xf]
    %v278 = vld [vmem:[%s3 + $0xc] sm:$0xf]
    %v279 = vld [vmem:[%s3 + $0x10] sm:$0xf]
    %v280 = vld [vmem:[%s3 + $0x14] sm:$0xf]
    %v281 = vld [vmem:[%s3 + $0x18] sm:$0xf]
    %v282 = vld [vmem:[%s3 + $0x1c] sm:$0xf]
    %v283 = vld [vmem:[%s3 + $0x20] sm:$0xf]
    %v284 = vld [vmem:[%s3 + $0x24] sm:$0xf]
    %v285 = vld [vmem:[%s3 + $0x28] sm:$0xf]
    %v286 = vld [vmem:[%s3 + $0x2c] sm:$0xf]
    %v287 = vld [vmem:[%s3 + $0x30] sm:$0xf]
    %v288 = vld [vmem:[%s3 + $0x34] sm:$0xf]
    %v289 = vld [vmem:[%s3 + $0x38] sm:$0xf]
    %v290 = vld [vmem:[%s3 + $0x3c] sm:$0xf]
    %v291 = vpack.c.bf16 %v260, %v259
    %v292 = vpack.c.bf16 %v262, %v261
    %v293 = vpack.c.bf16 %v264, %v263
    %v294 = vpack.c.bf16 %v266, %v265
    %v295 = vpack.c.bf16 %v268, %v267
    %v296 = vpack.c.bf16 %v270, %v269
    %v297 = vpack.c.bf16 %v272, %v271
    %v298 = vpack.c.bf16 %v274, %v273
    %v299 = vld [vmem:[%s4] sm:$0xff]
    %v300 = vld [vmem:[%s4 + $0x8] sm:$0xff]
    %v301 = vld [vmem:[%s4 + $0x10] sm:$0xff]
    %v302 = vld [vmem:[%s4 + $0x18] sm:$0xff]
    %v303 = vld [vmem:[%s4 + $0x20] sm:$0xff]
    %v304 = vld [vmem:[%s4 + $0x28] sm:$0xff]
    %v305 = vld [vmem:[%s4 + $0x30] sm:$0xff]
    %v306 = vld [vmem:[%s4 + $0x38] sm:$0xff]
    %v307 = vld [vmem:[%s4 + $0x40] sm:$0xff]
    %v308 = vld [vmem:[%s4 + $0x48] sm:$0xff]
    %v309 = vld [vmem:[%s4 + $0x50] sm:$0xff]
    %v310 = vld [vmem:[%s4 + $0x58] sm:$0xff]
    %v311 = vld [vmem:[%s4 + $0x60] sm:$0xff]
    %v312 = vld [vmem:[%s4 + $0x68] sm:$0xff]
    %v313 = vld [vmem:[%s4 + $0x70] sm:$0xff]
    %v314 = vld [vmem:[%s4 + $0x78] sm:$0xff]
    %316 = vset.pattern.permute.xlu0 0
    %317 = vperm.xlu0 %316, %v299
    %v318 = vpop.permute.xlu0 %317
    %321 = vset.pattern.permute.xlu0 0
    %322 = vperm.xlu0 %321, %v300
    %v323 = vpop.permute.xlu0 %322
    %326 = vset.pattern.permute.xlu0 0
    %327 = vperm.xlu0 %326, %v301
    %v328 = vpop.permute.xlu0 %327
    %331 = vset.pattern.permute.xlu0 0
    %332 = vperm.xlu0 %331, %v302
    %v333 = vpop.permute.xlu0 %332
    %336 = vset.pattern.permute.xlu0 0
    %337 = vperm.xlu0 %336, %v303
    %v338 = vpop.permute.xlu0 %337
    %341 = vset.pattern.permute.xlu0 0
    %342 = vperm.xlu0 %341, %v304
    %v343 = vpop.permute.xlu0 %342
    %346 = vset.pattern.permute.xlu0 0
    %347 = vperm.xlu0 %346, %v305
    %v348 = vpop.permute.xlu0 %347
    %351 = vset.pattern.permute.xlu0 0
    %352 = vperm.xlu0 %351, %v306
    %v353 = vpop.permute.xlu0 %352
    %356 = vset.pattern.permute.xlu0 0
    %357 = vperm.xlu0 %356, %v307
    %v358 = vpop.permute.xlu0 %357
    %361 = vset.pattern.permute.xlu0 0
    %362 = vperm.xlu0 %361, %v308
    %v363 = vpop.permute.xlu0 %362
    %366 = vset.pattern.permute.xlu0 0
    %367 = vperm.xlu0 %366, %v309
    %v368 = vpop.permute.xlu0 %367
    %371 = vset.pattern.permute.xlu0 0
    %372 = vperm.xlu0 %371, %v310
    %v373 = vpop.permute.xlu0 %372
    %376 = vset.pattern.permute.xlu0 0
    %377 = vperm.xlu0 %376, %v311
    %v378 = vpop.permute.xlu0 %377
    %381 = vset.pattern.permute.xlu0 0
    %382 = vperm.xlu0 %381, %v312
    %v383 = vpop.permute.xlu0 %382
    %386 = vset.pattern.permute.xlu0 0
    %387 = vperm.xlu0 %386, %v313
    %v388 = vpop.permute.xlu0 %387
    %391 = vset.pattern.permute.xlu0 0
    %392 = vperm.xlu0 %391, %v314
    %v393 = vpop.permute.xlu0 %392
    %v411 = vunpack.c.l.b16 %v275
    %v412 = vunpack.c.l.b16 %v276
    %v413 = vunpack.c.l.b16 %v277
    %v414 = vunpack.c.l.b16 %v278
    %v415 = vunpack.c.l.b16 %v279
    %v416 = vunpack.c.l.b16 %v280
    %v417 = vunpack.c.l.b16 %v281
    %v418 = vunpack.c.l.b16 %v282
    %v419 = vunpack.c.l.b16 %v283
    %v420 = vunpack.c.l.b16 %v284
    %v421 = vunpack.c.l.b16 %v285
    %v422 = vunpack.c.l.b16 %v286
    %v423 = vunpack.c.l.b16 %v287
    %v424 = vunpack.c.l.b16 %v288
    %v425 = vunpack.c.l.b16 %v289
    %v426 = vunpack.c.l.b16 %v290
    %v427 = vpack.c.b16 %v412, %v411
    %v428 = vpack.c.b16 %v414, %v413
    %v429 = vpack.c.b16 %v416, %v415
    %v430 = vpack.c.b16 %v418, %v417
    %v431 = vpack.c.b16 %v420, %v419
    %v432 = vpack.c.b16 %v422, %v421
    %v433 = vpack.c.b16 %v424, %v423
    %v434 = vpack.c.b16 %v426, %v425
    %443 = vmatpush.bf16.msra.mxu0 %v298
    %444 = vmatpush.bf16.msra.mxu0 %v297
    %445 = vmatpush.bf16.msra.mxu0 %v296
    %446 = vmatpush.bf16.msra.mxu0 %v295
    %447 = vmatpush.bf16.msra.mxu0 %v294
    %448 = vmatpush.bf16.msra.mxu0 %v293
    %449 = vmatpush.bf16.msra.mxu0 %v292
    %450 = vmatpush.bf16.msra.mxu0 %v291
    %451 = vmatmul.bf16.gmra.mxu0 %v427
    %v452 = vpop.f32.mrf.mxu0
    %v453 = vadd.f32 %v318, %v452
    %v454 = vpop.f32.mrf.mxu0
    %v455 = vadd.f32 %v323, %v454
    %456 = vmatmul.bf16.gmra.mxu0 %v428
    %v457 = vpop.f32.mrf.mxu0
    %v458 = vadd.f32 %v328, %v457
    %v459 = vpop.f32.mrf.mxu0
    %v460 = vadd.f32 %v333, %v459
    %461 = vmatmul.bf16.gmra.mxu0 %v429
    %v462 = vpop.f32.mrf.mxu0
    %v463 = vadd.f32 %v338, %v462
    %v464 = vpop.f32.mrf.mxu0
    %v465 = vadd.f32 %v343, %v464
    %466 = vmatmul.bf16.gmra.mxu0 %v430
    %v467 = vpop.f32.mrf.mxu0
    %v468 = vadd.f32 %v348, %v467
    %v469 = vpop.f32.mrf.mxu0
    %v470 = vadd.f32 %v353, %v469
    %471 = vmatmul.bf16.gmra.mxu0 %v431
    %v472 = vpop.f32.mrf.mxu0
    %v473 = vadd.f32 %v358, %v472
    %v474 = vpop.f32.mrf.mxu0
    %v475 = vadd.f32 %v363, %v474
    %476 = vmatmul.bf16.gmra.mxu0 %v432
    %v477 = vpop.f32.mrf.mxu0
    %v478 = vadd.f32 %v368, %v477
    %v479 = vpop.f32.mrf.mxu0
    %v480 = vadd.f32 %v373, %v479
    %481 = vmatmul.bf16.gmra.mxu0 %v433
    %v482 = vpop.f32.mrf.mxu0
    %v483 = vadd.f32 %v378, %v482
    %v484 = vpop.f32.mrf.mxu0
    %v485 = vadd.f32 %v383, %v484
    %486 = vmatmul.bf16.gmra.mxu0 %v434
    %v487 = vpop.f32.mrf.mxu0
    %v488 = vadd.f32 %v388, %v487
    %v489 = vpop.f32.mrf.mxu0
    %v490 = vadd.f32 %v393, %v489
    %491 = vdwg.mxu0
    %v492 = vmax.f32 %v453, 0.0
    %v493 = vmax.f32 %v455, 0.0
    %v494 = vmax.f32 %v458, 0.0
    %v495 = vmax.f32 %v460, 0.0
    %v496 = vmax.f32 %v463, 0.0
    %v497 = vmax.f32 %v465, 0.0
    %v498 = vmax.f32 %v468, 0.0
    %v499 = vmax.f32 %v470, 0.0
    %v500 = vmax.f32 %v473, 0.0
    %v501 = vmax.f32 %v475, 0.0
    %v502 = vmax.f32 %v478, 0.0
    %v503 = vmax.f32 %v480, 0.0
    %v504 = vmax.f32 %v483, 0.0
    %v505 = vmax.f32 %v485, 0.0
    %v506 = vmax.f32 %v488, 0.0
    %v507 = vmax.f32 %v490, 0.0
    %v508 = vld [vmem:[%s5] sm:$0x1]
    %v509 = vpack.c.bf16 %v493, %v492
    %v510 = vpack.c.bf16 %v495, %v494
    %v511 = vpack.c.bf16 %v497, %v496
    %v512 = vpack.c.bf16 %v499, %v498
    %v513 = vpack.c.bf16 %v501, %v500
    %v514 = vpack.c.bf16 %v503, %v502
    %v515 = vpack.c.bf16 %v505, %v504
    %v516 = vpack.c.bf16 %v507, %v506
    %v517 = vld [vmem:[%s6] sm:$0x3]
    %519 = vset.pattern.permute.xlu0 0
    %520 = vperm.xlu0 %519, %v517
    %v521 = vpop.permute.xlu0 %520
    %523 = vmatpush.bf16.msra.mxu0 %v516
    %524 = vmatpush.bf16.msra.mxu0 %v515
    %525 = vmatpush.bf16.msra.mxu0 %v514
    %526 = vmatpush.bf16.msra.mxu0 %v513
    %527 = vmatpush.bf16.msra.mxu0 %v512
    %528 = vmatpush.bf16.msra.mxu0 %v511
    %529 = vmatpush.bf16.msra.mxu0 %v510
    %530 = vmatpush.bf16.msra.mxu0 %v509
    %531 = vmatmul.bf16.gmra.mxu0 %v508
    %v532 = vpop.f32.mrf.mxu0
    %v533 = vadd.f32 %v521, %v532
    %v534 = vpop.f32.mrf.mxu0
    %535 = vdwg.mxu0
    %536 = vst [vmem:[#allocation2] sm:$0x3] %v533
    // Predicated region
    $region30: #{tpu_custom_call.1} parent=1 // pred_check
      _
    $region31: #{tpu_custom_call.1} parent=1 // pred_check_branch
      %538 = sbr.rel (0) target = $region33
    $region32: #{tpu_custom_call.1} parent=1 // pred_region
      %540 = vsyncadd [#allocation3], 0
      %s542 = sshll.u32 [#allocation2], 4
      %s543 = int_to_ptr.vmem [resolvable:$true] %s542
      %s544 = sshll.u32 %s7, 4
      %s545 = int_to_ptr.hbm [resolvable:$true] %s544
      %547 = dma.vmem_to_hbm [thread:$0]  %s543, 32, %s545, [#allocation3]
    $region33: #{tpu_custom_call.1} parent=1 // pred_fallthru
      _
    // Predicated region
    $region34: #{tpu_custom_call.1} parent=1 // pred_check
      _
    $region35: #{tpu_custom_call.1} parent=1 // pred_check_branch
      %549 = sbr.rel (0) target = $region37
    $region36: #{tpu_custom_call.1} parent=1 // pred_region
      %551 = dma.done [#allocation3], 32
    $region37: #{tpu_custom_call.1} parent=1 // pred_fallthru
      _
    %552 = vsyncpa [#allocation3], 1

</llo_original>
